<compile_context>
chip_gen: v7x
topology: tpu7x:2x2x1
jax: 0.10.0
libtpu: 0.0.40
codegen_flags: <defaults>
</compile_context>

<pallas_src>
import functools

import jax
import jax.numpy as jnp
from jax import lax
from jax.experimental import pallas as pl
from jax.experimental.pallas import tpu as pltpu


def _round_up(x, m):
    return (x + m - 1) // m * m


def _pick_tile(dim, target, align):
    """Largest multiple of `align` <= target that divides `dim` (dim % align == 0)."""
    t = max(align, (min(target, dim) // align) * align)
    while dim % t != 0:
        t -= align
    return t


# ----------------------------------------------------------------------------
# 1) Tiled matmul kernel: bf16 operands, f32 accumulation directly into o_ref
# ----------------------------------------------------------------------------
def _matmul_kernel(a_ref, b_ref, o_ref, *, fuse_relu):
    k = pl.program_id(2)

    @pl.when(k == 0)
    def _():
        o_ref[...] = jnp.zeros_like(o_ref)

    o_ref[...] += jnp.dot(a_ref[...], b_ref[...],
                          preferred_element_type=jnp.float32)

    if fuse_relu:
        @pl.when(k == pl.num_programs(2) - 1)
        def _():
            o_ref[...] = jnp.maximum(o_ref[...], 0.0)


def matmul_padded(a, b, *, fuse_relu=False, tm=512, tn=512, tk=1024):
    """(M,K)@(K,N)->f32 (M,N) on pre-padded operands (M%8==0, K%128==0, N%128==0)."""
    M, K = a.shape
    K2, N = b.shape
    assert K == K2 and M % 8 == 0 and K % 128 == 0 and N % 128 == 0
    tm = _pick_tile(M, tm, 8)
    tn = _pick_tile(N, tn, 128)
    tk = _pick_tile(K, tk, 128)
    return pl.pallas_call(
        functools.partial(_matmul_kernel, fuse_relu=fuse_relu),
        out_shape=jax.ShapeDtypeStruct((M, N), jnp.float32),
        grid=(M // tm, N // tn, K // tk),
        in_specs=[
            pl.BlockSpec((tm, tk), lambda i, j, k: (i, k)),
            pl.BlockSpec((tk, tn), lambda i, j, k: (k, j)),
        ],
        out_specs=pl.BlockSpec((tm, tn), lambda i, j, k: (i, j)),
        compiler_params=pltpu.CompilerParams(
            dimension_semantics=("parallel", "parallel", "arbitrary"),
        ),
    )(a, b)


# ----------------------------------------------------------------------------
# 2) Fused dual AvgReadout + L2-normalize + sigmoid (one pass over graph_neigh)
#    emb_cat = [emb | emb_a]  (Np, 2*Dp);  output = [g | g_a]  (Np, 2*Dp)
# ----------------------------------------------------------------------------
def _dual_readout_kernel(mask_ref, emb_ref, rinv_ref, out_ref, acc_ref, *, dp):
    k = pl.program_id(1)

    @pl.when(k == 0)
    def _():
        acc_ref[...] = jnp.zeros_like(acc_ref)

    acc_ref[...] += jnp.dot(mask_ref[...], emb_ref[...],
                            preferred_element_type=jnp.float32)

    @pl.when(k == pl.num_programs(1) - 1)
    def _():
        g = acc_ref[...] * rinv_ref[...]               # (tm, 2dp) * (tm, 1)
        col = lax.broadcasted_iota(jnp.int32, g.shape, 1)
        left = col < dp
        gg = g * g
        # per-half row L2 norm (padded columns are zero so they do not contribute)
        sq_l = jnp.sum(jnp.where(left, gg, 0.0), axis=1, keepdims=True)
        sq_r = jnp.sum(jnp.where(left, 0.0, gg), axis=1, keepdims=True)
        inv = jnp.where(left,
                        lax.rsqrt(jnp.maximum(sq_l, 1e-24)),
                        lax.rsqrt(jnp.maximum(sq_r, 1e-24)))
        out_ref[...] = jax.nn.sigmoid(g * inv).astype(out_ref.dtype)


def dual_avg_readout_sigmoid(mask_p, emb_cat_p, rinv_p, dp, *, tm=512, tn=512):
    M, Ncols = mask_p.shape
    N2, D2 = emb_cat_p.shape
    assert Ncols == N2 and D2 == 2 * dp
    tm = _pick_tile(M, tm, 8)
    tn = _pick_tile(Ncols, tn, 128)
    return pl.pallas_call(
        functools.partial(_dual_readout_kernel, dp=dp),
        out_shape=jax.ShapeDtypeStruct((M, D2), jnp.float32),
        grid=(M // tm, Ncols // tn),
        in_specs=[
            pl.BlockSpec((tm, tn), lambda i, k: (i, k)),   # graph_neigh tile
            pl.BlockSpec((tn, D2), lambda i, k: (k, 0)),   # [emb | emb_a] tile
            pl.BlockSpec((tm, 1), lambda i, k: (i, 0)),    # precomputed 1/rowsum
        ],
        out_specs=pl.BlockSpec((tm, D2), lambda i, k: (i, 0)),
        scratch_shapes=[pltpu.VMEM((tm, D2), jnp.float32)],
        compiler_params=pltpu.CompilerParams(
            dimension_semantics=("parallel", "arbitrary"),
        ),
    )(mask_p, emb_cat_p, rinv_p)


# ----------------------------------------------------------------------------
# 3) Merged bilinear discriminator: both ret and ret_a in one kernel,
#    lane-dense (tr, 128) output (cols 0,1 = ret; cols 2,3 = ret_a)
# ----------------------------------------------------------------------------
def _bilinear_disc_kernel(g_ref, ga_ref, hpl_ref, hmi_ref, wt_ref, b_ref, out_ref):
    cw = jnp.dot(g_ref[...], wt_ref[...], preferred_element_type=jnp.float32)
    cwa = jnp.dot(ga_ref[...], wt_ref[...], preferred_element_type=jnp.float32)
    hpl = hpl_ref[...].astype(jnp.float32)   # emb
    hmi = hmi_ref[...].astype(jnp.float32)   # emb_a
    b = b_ref[0, 0]
    sc1 = jnp.sum(hpl * cw, axis=1, keepdims=True) + b    # ret[:,0]
    sc2 = jnp.sum(hmi * cw, axis=1, keepdims=True) + b    # ret[:,1]
    sc1a = jnp.sum(hmi * cwa, axis=1, keepdims=True) + b  # ret_a[:,0]
    sc2a = jnp.sum(hpl * cwa, axis=1, keepdims=True) + b  # ret_a[:,1]
    col = lax.broadcasted_iota(jnp.int32, out_ref.shape, 1)
    out = (jnp.where(col == 0, sc1, 0.0) + jnp.where(col == 1, sc2, 0.0)
           + jnp.where(col == 2, sc1a, 0.0) + jnp.where(col == 3, sc2a, 0.0))
    out_ref[...] = out.astype(out_ref.dtype)


def bilinear_disc(g_p, ga_p, emb_p, emba_p, wt_p, b, *, tr=512):
    R, H = g_p.shape
    assert R % 8 == 0 and H % 128 == 0
    tr = _pick_tile(R, tr, 8)
    b_arr = jnp.full((1, 1), b, dtype=jnp.float32)
    return pl.pallas_call(
        _bilinear_disc_kernel,
        out_shape=jax.ShapeDtypeStruct((R, 128), jnp.float32),
        grid=(R // tr,),
        in_specs=[
            pl.BlockSpec((tr, H), lambda i: (i, 0)),
            pl.BlockSpec((tr, H), lambda i: (i, 0)),
            pl.BlockSpec((tr, H), lambda i: (i, 0)),
            pl.BlockSpec((tr, H), lambda i: (i, 0)),
            pl.BlockSpec((H, H), lambda i: (0, 0)),
            pl.BlockSpec(memory_space=pltpu.MemorySpace.SMEM),   # scalar bias
        ],
        out_specs=pl.BlockSpec((tr, 128), lambda i: (i, 0)),
        compiler_params=pltpu.CompilerParams(
            dimension_semantics=("parallel",),
        ),
    )(g_p, ga_p, emb_p, emba_p, wt_p, b_arr)


# ----------------------------------------------------------------------------
# Full Encoder_sparse forward (padding hoisted, intermediates stay padded)
# ----------------------------------------------------------------------------
def encoder_sparse_forward(feat, feat_a, adj, graph_neigh, weight1, weight2,
                           disc_w, disc_b):
    # TODO(synk): dropout (p=0.0 default / eval mode) is identity; torch.spmm's
    # sparse adjacency is realized as a dense tiled bf16 matmul.
    f32, bf16 = jnp.float32, jnp.bfloat16
    N, Fi = feat.shape
    Fo = weight1.shape[1]
    Np = _round_up(N, 128)    # N also serves as a K / lane dim (adj, graph_neigh)
    Fip = _round_up(Fi, 128)
    Fop = _round_up(Fo, 128)

    def pad2(x, r, c, dt=bf16):
        return jnp.zeros((r, c), dt).at[:x.shape[0], :x.shape[1]].set(x.astype(dt))

    # Pad once (bf16 MXU operands); everything downstream stays in padded layout.
    feat_p = pad2(feat, Np, Fip)
    feat_a_p = pad2(feat_a, Np, Fip)
    adj_p = pad2(adj, Np, Np)
    gn_p = pad2(graph_neigh, Np, Np)
    w1_p = pad2(weight1, Fip, Fop)
    w2_p = pad2(weight2, Fop, Fip)
    wt_p = pad2(jnp.transpose(disc_w), Fop, Fop)

    # 1 / graph_neigh row-sum, computed once on the host (padded rows -> 0).
    rsum = jnp.sum(graph_neigh.astype(f32), axis=1)
    rinv_p = jnp.zeros((Np, 1), f32).at[:N, 0].set(
        jnp.where(rsum > 0, 1.0 / rsum, 0.0))

    # Stage 1: shared-W1 matmul for feat and feat_a (batched along rows).
    fcat = jnp.concatenate([feat_p, feat_a_p], axis=0)          # (2Np, Fip) bf16
    z_both = matmul_padded(fcat, w1_p)                          # (2Np, Fop) f32

    # Stage 2: adj propagation of z and z_a batched along lanes (adj read once).
    z_pair = jnp.concatenate([z_both[:Np], z_both[Np:]], axis=1).astype(bf16)
    prop = matmul_padded(adj_p, z_pair)                         # (Np, 2Fop) f32
    z_p = prop[:, :Fop]                                         # hiden_emb (padded)
    z_a_p = prop[:, Fop:]
    emb_p = jnp.maximum(z_p, 0.0)
    emb_a_p = jnp.maximum(z_a_p, 0.0)

    # Stage 3: h = adj @ (z @ W2)
    h0 = matmul_padded(z_p.astype(bf16), w2_p)                  # (Np, Fip) f32
    h_p = matmul_padded(adj_p, h0.astype(bf16))                 # (Np, Fip) f32

    # Stage 4: fused dual AvgReadout + sigmoid (graph_neigh read once).
    emb_cat = jnp.concatenate([emb_p, emb_a_p], axis=1).astype(bf16)  # (Np, 2Fop)
    g_cat = dual_avg_readout_sigmoid(gn_p, emb_cat, rinv_p, Fop)      # (Np, 2Fop)
    g_p, g_a_p = g_cat[:, :Fop], g_cat[:, Fop:]

    # Stage 5: merged bilinear discriminator (shared W^T, lane-dense output).
    scores = bilinear_disc(g_p.astype(bf16), g_a_p.astype(bf16),
                           emb_p.astype(bf16), emb_a_p.astype(bf16),
                           wt_p, disc_b)                              # (Np, 128)

    hiden_emb = z_p[:N, :Fo]
    h = h_p[:N, :Fi]
    ret = scores[:N, 0:2]
    ret_a = scores[:N, 2:4]
    return hiden_emb, h, ret, ret_a


# ----------------------------------------------------------------------------
# Pure-JAX f32 reference mirroring the PyTorch forward
# ----------------------------------------------------------------------------
def encoder_sparse_ref(feat, feat_a, adj, graph_neigh, w1, w2, disc_w, disc_b):
    mm = functools.partial(jnp.matmul, precision=lax.Precision.HIGHEST)

    def read(emb, mask):
        vsum = mm(mask, emb)
        row_sum = jnp.sum(mask, axis=1, keepdims=True)
        ge = vsum / row_sum
        nrm = jnp.maximum(
            jnp.sqrt(jnp.sum(ge * ge, axis=1, keepdims=True)), 1e-12)
        return ge / nrm

    def disc(c, h_pl, h_mi):
        cw = mm(c, disc_w.T)
        sc1 = jnp.sum(h_pl * cw, axis=1, keepdims=True) + disc_b
        sc2 = jnp.sum(h_mi * cw, axis=1, keepdims=True) + disc_b
        return jnp.concatenate([sc1, sc2], axis=1)

    z = mm(adj, mm(feat, w1))
    hiden = z
    h = mm(adj, mm(z, w2))
    emb = jnp.maximum(z, 0.0)
    z_a = mm(adj, mm(feat_a, w1))
    emb_a = jnp.maximum(z_a, 0.0)
    g = jax.nn.sigmoid(read(emb, graph_neigh))
    g_a = jax.nn.sigmoid(read(emb_a, graph_neigh))
    return hiden, h, disc(g, emb, emb_a), disc(g_a, emb_a, emb)


if __name__ == "__main__":
    key = jax.random.PRNGKey(0)
    ks = jax.random.split(key, 7)

    n_nodes, in_feats, out_feats = 24, 48, 32
    feat = jax.random.normal(ks[0], (n_nodes, in_feats), dtype=jnp.float32)
    feat_a = jax.random.normal(ks[1], (n_nodes, in_feats), dtype=jnp.float32)

    # Dense row-normalized adjacency (stand-in for the sparse adj of torch.spmm).
    adj_bin = (jax.random.uniform(ks[2], (n_nodes, n_nodes)) < 0.3).astype(jnp.float32)
    adj_bin = adj_bin + jnp.eye(n_nodes, dtype=jnp.float32)
    adj = adj_bin / jnp.sum(adj_bin, axis=1, keepdims=True)

    # graph_neigh: binary neighbourhood mask with self-loops (no zero rows).
    gmask = (jax.random.uniform(ks[3], (n_nodes, n_nodes)) < 0.25).astype(jnp.float32)
    graph_neigh = jnp.clip(gmask + jnp.eye(n_nodes, dtype=jnp.float32), 0.0, 1.0)

    w1 = 0.1 * jax.random.normal(ks[4], (in_feats, out_feats), dtype=jnp.float32)
    w2 = 0.1 * jax.random.normal(ks[5], (out_feats, in_feats), dtype=jnp.float32)
    disc_w = 0.1 * jax.random.normal(ks[6], (out_feats, out_feats), dtype=jnp.float32)
    disc_b = 0.0   # nn.Bilinear bias initialized to 0 in the module

    outs = encoder_sparse_forward(feat, feat_a, adj, graph_neigh, w1, w2,
                                  disc_w, disc_b)
    outs = jax.block_until_ready(outs)
    refs = encoder_sparse_ref(feat, feat_a, adj, graph_neigh, w1, w2,
                              disc_w, disc_b)

    # Tolerances account for bf16 MXU operands (f32 accumulation) vs f32 reference.
    tols = {"hiden_emb": 3e-2, "h": 3e-2, "ret": 6e-2, "ret_a": 6e-2}
    for name, o, r in zip(("hiden_emb", "h", "ret", "ret_a"), outs, refs):
        assert o.shape == r.shape, f"{name} shape mismatch: {o.shape} vs {r.shape}"
        assert bool(jnp.all(jnp.isfinite(o))), f"{name} has non-finite values"
        t = tols[name]
        assert jnp.allclose(o, r, atol=t, rtol=t), f"{name} mismatch vs ref"

    print("KERNEL_OK")
</pallas_src>

<mosaic_0001>
module attributes {stable_mosaic.version = 11 : i64} {
  func.func @_matmul_kernel(%arg0: i32, %arg1: i32, %arg2: i32, %arg3: memref<256x128xbf16, #tpu.memory_space<vmem>>, %arg4: memref<128x128xbf16, #tpu.memory_space<vmem>>, %arg5: memref<256x128xf32, #tpu.memory_space<vmem>>) attributes {dimension_semantics = [#tpu.dimension_semantics<parallel>, #tpu.dimension_semantics<parallel>, #tpu.dimension_semantics<arbitrary>], iteration_bounds = array<i64: 1, 1, 1>, scalar_prefetch = 0 : i64, scratch_operands = 0 : i64, tpu.core_type = #tpu.core_type<tc>, window_params = [{transform_indices = @transform_0, window_bounds = array<i64: 256, 128>}, {transform_indices = @transform_1, window_bounds = array<i64: 128, 128>}, {transform_indices = @transform_2, window_bounds = array<i64: 256, 128>}]} {
    %c0_i32 = arith.constant 0 : i32
    %0 = arith.cmpi eq, %arg2, %c0_i32 : i32
    %1 = arith.extui %0 : i1 to i32
    %c0_i32_0 = arith.constant 0 : i32
    %2 = arith.cmpi ne, %1, %c0_i32_0 : i32
    scf.if %2 {
      %cst_8 = arith.constant 0.000000e+00 : f32
      %9 = vector.broadcast %cst_8 : f32 to vector<256x128xf32>
      %c0_9 = arith.constant 0 : index
      %c0_10 = arith.constant 0 : index
      %10 = vector.load %arg5[%c0_9, %c0_10] : memref<256x128xf32, #tpu.memory_space<vmem>>, vector<256x128xf32>
      tpu.vector_store %arg5[%c0_9, %c0_10], %9 {strides = array<i32>} : memref<256x128xf32, #tpu.memory_space<vmem>>, vector<256x128xf32>,
    } else {
    }
    %c0 = arith.constant 0 : index
    %c0_1 = arith.constant 0 : index
    %3 = vector.load %arg5[%c0, %c0_1] : memref<256x128xf32, #tpu.memory_space<vmem>>, vector<256x128xf32>
    %c0_2 = arith.constant 0 : index
    %c0_3 = arith.constant 0 : index
    %4 = vector.load %arg3[%c0_2, %c0_3] : memref<256x128xbf16, #tpu.memory_space<vmem>>, vector<256x128xbf16>
    %c0_4 = arith.constant 0 : index
    %c0_5 = arith.constant 0 : index
    %5 = vector.load %arg4[%c0_4, %c0_5] : memref<128x128xbf16, #tpu.memory_space<vmem>>, vector<128x128xbf16>
    %cst = arith.constant dense<0.000000e+00> : vector<256x128xf32>
    %6 = tpu.matmul %4, %5, %cst {dimension_numbers = #tpu.dot_dimension_numbers<[1], [0], [0], [1], [0, 0, 1, 1], [], []>} : vector<256x128xbf16>, vector<128x128xbf16>, vector<256x128xf32> -> vector<256x128xf32>
    %7 = arith.addf %3, %6 : vector<256x128xf32>
    %c0_6 = arith.constant 0 : index
    %c0_7 = arith.constant 0 : index
    %8 = vector.load %arg5[%c0_6, %c0_7] : memref<256x128xf32, #tpu.memory_space<vmem>>, vector<256x128xf32>
    tpu.vector_store %arg5[%c0_6, %c0_7], %7 {strides = array<i32>} : memref<256x128xf32, #tpu.memory_space<vmem>>, vector<256x128xf32>,
    return
  }
  func.func @transform_0(%arg0: i32, %arg1: i32, %arg2: i32) -> (i32, i32) {
    %c0_i32 = arith.constant 0 : i32
    return %arg0, %arg2 : i32, i32
  }
  func.func @transform_1(%arg0: i32, %arg1: i32, %arg2: i32) -> (i32, i32) {
    %c0_i32 = arith.constant 0 : i32
    return %arg2, %arg1 : i32, i32
  }
  func.func @transform_2(%arg0: i32, %arg1: i32, %arg2: i32) -> (i32, i32) {
    %c0_i32 = arith.constant 0 : i32
    return %arg0, %arg1 : i32, i32
  }
}

</mosaic_0001>

<llo_original>
// kernel: tpu_custom_call.1
$region0: #{tpu_custom_call.1}
  #allocation0 [shape = 'u32[]', space=smem, size = 0x4, offset = 0x4, fixed_abs, tag = 'smem constant byte address 0x4 - core index']
  #allocation1 [shape = 'u32[144,128]{1,0:T(1,128)}', space=vmem, size = 0x12000, scoped, tag = 'internal scratch']
  %s0 = inlined_call_operand.hbm [shape: bf16[256,128], index: 0, kind: input, shape index: {}]
  %s1 = inlined_call_operand.hbm [shape: bf16[128,128], index: 1, kind: input, shape index: {}]
  %s2 = inlined_call_operand.hbm [shape: f32[256,128], index: 2, kind: output, shape index: {}]
  %s3 = sld [smem:[#allocation0]]
  $region30: #{tpu_custom_call.1} parent=0
    _
  %s5 = ssub.s32 1, %s3
  %s6 = scalar_select 0, %s5, %s3
  $region1: #{tpu_custom_call.1} parent=0
    #allocation2 [shape = 'u8[65536]{0}', space=vmem, size = 0x10000, scoped, tag = 'input window, operand 0, single buffered']
    #allocation3 [shape = 's32[1]{0}', space=sflag, size = 0x4, scoped, tag = 'scoped memory for tpu_custom_call.1']
    #allocation4 [shape = 's32[1]{0}', space=sflag, size = 0x4, scoped, tag = 'scoped memory for tpu_custom_call.1']
    #allocation5 [shape = 'u8[32768]{0}', space=vmem, size = 0x8000, scoped, tag = 'input window, operand 1, single buffered']
    #allocation6 [shape = 's32[1]{0}', space=sflag, size = 0x4, scoped, tag = 'scoped memory for tpu_custom_call.1']
    #allocation7 [shape = 'u8[131072]{0}', space=vmem, size = 0x20000, scoped, tag = 'output window, operand 0, single buffered']
    %7 = vsyncpa [#allocation3], 0
    %8 = vsyncpa [#allocation6], 0
    %9 = vsyncpa [#allocation4], 0
    // Predicated region
    $region2: #{tpu_custom_call.1} parent=1 // pred_check
      _
    $region3: #{tpu_custom_call.1} parent=1 // pred_check_branch
      %11 = sbr.rel (0) target = $region5
    $region4: #{tpu_custom_call.1} parent=1 // pred_region
      %s13 = ssub.s32 2048, 2048
      %14 = vsyncadd [#allocation3], %s13
      %s15 = sshll.u32 [#allocation2], 4
      %s16 = int_to_ptr.vmem [resolvable:$true] %s15
      %21 = dma.hbm_to_vmem [thread:$0]  %s0, 2048, %s16, [#allocation3], 64, 64, 4
    $region5: #{tpu_custom_call.1} parent=1 // pred_fallthru
      _
    // Predicated region
    $region6: #{tpu_custom_call.1} parent=1 // pred_check
      _
    $region7: #{tpu_custom_call.1} parent=1 // pred_check_branch
      %23 = sbr.rel (0) target = $region9
    $region8: #{tpu_custom_call.1} parent=1 // pred_region
      %s25 = ssub.s32 1024, 1024
      %26 = vsyncadd [#allocation6], %s25
      %s27 = sshll.u32 [#allocation5], 4
      %s28 = int_to_ptr.vmem [resolvable:$true] %s27
      %33 = dma.hbm_to_vmem [thread:$0]  %s1, 1024, %s28, [#allocation6], 64, 64, 4
    $region9: #{tpu_custom_call.1} parent=1 // pred_fallthru
      _
    // Predicated region
    $region10: #{tpu_custom_call.1} parent=1 // pred_check
      _
    $region11: #{tpu_custom_call.1} parent=1 // pred_check_branch
      %35 = sbr.rel (0) target = $region13
    $region12: #{tpu_custom_call.1} parent=1 // pred_region
      %36 = dma.done [#allocation3], 2048
    $region13: #{tpu_custom_call.1} parent=1 // pred_fallthru
      _
    // Predicated region
    $region14: #{tpu_custom_call.1} parent=1 // pred_check
      _
    $region15: #{tpu_custom_call.1} parent=1 // pred_check_branch
      %38 = sbr.rel (0) target = $region17
    $region16: #{tpu_custom_call.1} parent=1 // pred_region
      %39 = dma.done [#allocation6], 1024
    $region17: #{tpu_custom_call.1} parent=1 // pred_fallthru
      _
    %p41 = scmp.eq.s32.totalorder 0, 0
    // Predicated region
    $region18: #{tpu_custom_call.1} parent=1 // pred_check
      %p42 = pneg %p41
    $region19: #{tpu_custom_call.1} parent=1 // pred_check_branch
      %44 = sbr.rel (%p42) target = $region21
    $region20: #{tpu_custom_call.1} parent=1 // pred_region
      %45 = vst [vmem:[#allocation7] sm:$0xff] 0.0
      %46 = vst [vmem:[#allocation7 + $0x8] sm:$0xff] 0.0
      %47 = vst [vmem:[#allocation7 + $0x10] sm:$0xff] 0.0
      %48 = vst [vmem:[#allocation7 + $0x18] sm:$0xff] 0.0
      %49 = vst [vmem:[#allocation7 + $0x20] sm:$0xff] 0.0
      %50 = vst [vmem:[#allocation7 + $0x28] sm:$0xff] 0.0
      %51 = vst [vmem:[#allocation7 + $0x30] sm:$0xff] 0.0
      %52 = vst [vmem:[#allocation7 + $0x38] sm:$0xff] 0.0
      %53 = vst [vmem:[#allocation7 + $0x40] sm:$0xff] 0.0
      %54 = vst [vmem:[#allocation7 + $0x48] sm:$0xff] 0.0
      %55 = vst [vmem:[#allocation7 + $0x50] sm:$0xff] 0.0
      %56 = vst [vmem:[#allocation7 + $0x58] sm:$0xff] 0.0
      %57 = vst [vmem:[#allocation7 + $0x60] sm:$0xff] 0.0
      %58 = vst [vmem:[#allocation7 + $0x68] sm:$0xff] 0.0
      %59 = vst [vmem:[#allocation7 + $0x70] sm:$0xff] 0.0
      %60 = vst [vmem:[#allocation7 + $0x78] sm:$0xff] 0.0
      %61 = vst [vmem:[#allocation7 + $0x80] sm:$0xff] 0.0
      %62 = vst [vmem:[#allocation7 + $0x88] sm:$0xff] 0.0
      %63 = vst [vmem:[#allocation7 + $0x90] sm:$0xff] 0.0
      %64 = vst [vmem:[#allocation7 + $0x98] sm:$0xff] 0.0
      %65 = vst [vmem:[#allocation7 + $0xa0] sm:$0xff] 0.0
      %66 = vst [vmem:[#allocation7 + $0xa8] sm:$0xff] 0.0
      %67 = vst [vmem:[#allocation7 + $0xb0] sm:$0xff] 0.0
      %68 = vst [vmem:[#allocation7 + $0xb8] sm:$0xff] 0.0
      %69 = vst [vmem:[#allocation7 + $0xc0] sm:$0xff] 0.0
      %70 = vst [vmem:[#allocation7 + $0xc8] sm:$0xff] 0.0
      %71 = vst [vmem:[#allocation7 + $0xd0] sm:$0xff] 0.0
      %72 = vst [vmem:[#allocation7 + $0xd8] sm:$0xff] 0.0
      %73 = vst [vmem:[#allocation7 + $0xe0] sm:$0xff] 0.0
      %74 = vst [vmem:[#allocation7 + $0xe8] sm:$0xff] 0.0
      %75 = vst [vmem:[#allocation7 + $0xf0] sm:$0xff] 0.0
      %76 = vst [vmem:[#allocation7 + $0xf8] sm:$0xff] 0.0
    $region21: #{tpu_custom_call.1} parent=1 // pred_fallthru
      _
    %v77 = vld [vmem:[#allocation7] sm:$0xff]
    %v78 = vld [vmem:[#allocation7 + $0x8] sm:$0xff]
    %v79 = vld [vmem:[#allocation7 + $0x10] sm:$0xff]
    %v80 = vld [vmem:[#allocation7 + $0x18] sm:$0xff]
    %v81 = vld [vmem:[#allocation7 + $0x20] sm:$0xff]
    %v82 = vld [vmem:[#allocation7 + $0x28] sm:$0xff]
    %v83 = vld [vmem:[#allocation7 + $0x30] sm:$0xff]
    %v84 = vld [vmem:[#allocation7 + $0x38] sm:$0xff]
    %v85 = vld [vmem:[#allocation7 + $0x40] sm:$0xff]
    %v86 = vld [vmem:[#allocation7 + $0x48] sm:$0xff]
    %v87 = vld [vmem:[#allocation7 + $0x50] sm:$0xff]
    %v88 = vld [vmem:[#allocation7 + $0x58] sm:$0xff]
    %v89 = vld [vmem:[#allocation7 + $0x60] sm:$0xff]
    %v90 = vld [vmem:[#allocation7 + $0x68] sm:$0xff]
    %v91 = vld [vmem:[#allocation7 + $0x70] sm:$0xff]
    %v92 = vld [vmem:[#allocation7 + $0x78] sm:$0xff]
    %v93 = vld [vmem:[#allocation7 + $0x80] sm:$0xff]
    %v94 = vld [vmem:[#allocation7 + $0x88] sm:$0xff]
    %v95 = vld [vmem:[#allocation7 + $0x90] sm:$0xff]
    %v96 = vld [vmem:[#allocation7 + $0x98] sm:$0xff]
    %v97 = vld [vmem:[#allocation7 + $0xa0] sm:$0xff]
    %v98 = vld [vmem:[#allocation7 + $0xa8] sm:$0xff]
    %v99 = vld [vmem:[#allocation7 + $0xb0] sm:$0xff]
    %v100 = vld [vmem:[#allocation7 + $0xb8] sm:$0xff]
    %v101 = vld [vmem:[#allocation7 + $0xc0] sm:$0xff]
    %v102 = vld [vmem:[#allocation7 + $0xc8] sm:$0xff]
    %v103 = vld [vmem:[#allocation7 + $0xd0] sm:$0xff]
    %v104 = vld [vmem:[#allocation7 + $0xd8] sm:$0xff]
    %v105 = vld [vmem:[#allocation7 + $0xe0] sm:$0xff]
    %v106 = vld [vmem:[#allocation7 + $0xe8] sm:$0xff]
    %v107 = vld [vmem:[#allocation7 + $0xf0] sm:$0xff]
    %v108 = vld [vmem:[#allocation7 + $0xf8] sm:$0xff]
    %v109 = vld [vmem:[#allocation2] sm:$0xf]
    %v110 = vld [vmem:[#allocation2 + $0x4] sm:$0xf]
    %v111 = vld [vmem:[#allocation2 + $0x8] sm:$0xf]
    %v112 = vld [vmem:[#allocation2 + $0xc] sm:$0xf]
    %v113 = vld [vmem:[#allocation2 + $0x10] sm:$0xf]
    %v114 = vld [vmem:[#allocation2 + $0x14] sm:$0xf]
    %v115 = vld [vmem:[#allocation2 + $0x18] sm:$0xf]
    %v116 = vld [vmem:[#allocation2 + $0x1c] sm:$0xf]
    %v117 = vld [vmem:[#allocation2 + $0x20] sm:$0xf]
    %v118 = vld [vmem:[#allocation2 + $0x24] sm:$0xf]
    %v119 = vld [vmem:[#allocation2 + $0x28] sm:$0xf]
    %v120 = vld [vmem:[#allocation2 + $0x2c] sm:$0xf]
    %v121 = vld [vmem:[#allocation2 + $0x30] sm:$0xf]
    %v122 = vld [vmem:[#allocation2 + $0x34] sm:$0xf]
    %v123 = vld [vmem:[#allocation2 + $0x38] sm:$0xf]
    %v124 = vld [vmem:[#allocation2 + $0x3c] sm:$0xf]
    %v125 = vld [vmem:[#allocation2 + $0x40] sm:$0xf]
    %v126 = vld [vmem:[#allocation2 + $0x44] sm:$0xf]
    %v127 = vld [vmem:[#allocation2 + $0x48] sm:$0xf]
    %v128 = vld [vmem:[#allocation2 + $0x4c] sm:$0xf]
    %v129 = vld [vmem:[#allocation2 + $0x50] sm:$0xf]
    %v130 = vld [vmem:[#allocation2 + $0x54] sm:$0xf]
    %v131 = vld [vmem:[#allocation2 + $0x58] sm:$0xf]
    %v132 = vld [vmem:[#allocation2 + $0x5c] sm:$0xf]
    %v133 = vld [vmem:[#allocation2 + $0x60] sm:$0xf]
    %v134 = vld [vmem:[#allocation2 + $0x64] sm:$0xf]
    %v135 = vld [vmem:[#allocation2 + $0x68] sm:$0xf]
    %v136 = vld [vmem:[#allocation2 + $0x6c] sm:$0xf]
    %v137 = vld [vmem:[#allocation2 + $0x70] sm:$0xf]
    %v138 = vld [vmem:[#allocation2 + $0x74] sm:$0xf]
    %v139 = vld [vmem:[#allocation2 + $0x78] sm:$0xf]
    %v140 = vld [vmem:[#allocation2 + $0x7c] sm:$0xf]
    %v141 = vld [vmem:[#allocation5] sm:$0xf]
    %v142 = vld [vmem:[#allocation5 + $0x4] sm:$0xf]
    %v143 = vld [vmem:[#allocation5 + $0x8] sm:$0xf]
    %v144 = vld [vmem:[#allocation5 + $0xc] sm:$0xf]
    %v145 = vld [vmem:[#allocation5 + $0x10] sm:$0xf]
    %v146 = vld [vmem:[#allocation5 + $0x14] sm:$0xf]
    %v147 = vld [vmem:[#allocation5 + $0x18] sm:$0xf]
    %v148 = vld [vmem:[#allocation5 + $0x1c] sm:$0xf]
    %v149 = vld [vmem:[#allocation5 + $0x20] sm:$0xf]
    %v150 = vld [vmem:[#allocation5 + $0x24] sm:$0xf]
    %v151 = vld [vmem:[#allocation5 + $0x28] sm:$0xf]
    %v152 = vld [vmem:[#allocation5 + $0x2c] sm:$0xf]
    %v153 = vld [vmem:[#allocation5 + $0x30] sm:$0xf]
    %v154 = vld [vmem:[#allocation5 + $0x34] sm:$0xf]
    %v155 = vld [vmem:[#allocation5 + $0x38] sm:$0xf]
    %v156 = vld [vmem:[#allocation5 + $0x3c] sm:$0xf]
    %v189 = vunpack.c.l.b16 %v109
    %v190 = vunpack.c.l.b16 %v110
    %v191 = vunpack.c.l.b16 %v111
    %v192 = vunpack.c.l.b16 %v112
    %v193 = vunpack.c.l.b16 %v113
    %v194 = vunpack.c.l.b16 %v114
    %v195 = vunpack.c.l.b16 %v115
    %v196 = vunpack.c.l.b16 %v116
    %v197 = vunpack.c.l.b16 %v117
    %v198 = vunpack.c.l.b16 %v118
    %v199 = vunpack.c.l.b16 %v119
    %v200 = vunpack.c.l.b16 %v120
    %v201 = vunpack.c.l.b16 %v121
    %v202 = vunpack.c.l.b16 %v122
    %v203 = vunpack.c.l.b16 %v123
    %v204 = vunpack.c.l.b16 %v124
    %v205 = vunpack.c.l.b16 %v125
    %v206 = vunpack.c.l.b16 %v126
    %v207 = vunpack.c.l.b16 %v127
    %v208 = vunpack.c.l.b16 %v128
    %v209 = vunpack.c.l.b16 %v129
    %v210 = vunpack.c.l.b16 %v130
    %v211 = vunpack.c.l.b16 %v131
    %v212 = vunpack.c.l.b16 %v132
    %v213 = vunpack.c.l.b16 %v133
    %v214 = vunpack.c.l.b16 %v134
    %v215 = vunpack.c.l.b16 %v135
    %v216 = vunpack.c.l.b16 %v136
    %v217 = vunpack.c.l.b16 %v137
    %v218 = vunpack.c.l.b16 %v138
    %v219 = vunpack.c.l.b16 %v139
    %v220 = vunpack.c.l.b16 %v140
    %v221 = vpack.c.b16 %v190, %v189
    %v222 = vpack.c.b16 %v192, %v191
    %v223 = vpack.c.b16 %v194, %v193
    %v224 = vpack.c.b16 %v196, %v195
    %v225 = vpack.c.b16 %v198, %v197
    %v226 = vpack.c.b16 %v200, %v199
    %v227 = vpack.c.b16 %v202, %v201
    %v228 = vpack.c.b16 %v204, %v203
    %v229 = vpack.c.b16 %v206, %v205
    %v230 = vpack.c.b16 %v208, %v207
    %v231 = vpack.c.b16 %v210, %v209
    %v232 = vpack.c.b16 %v212, %v211
    %v233 = vpack.c.b16 %v214, %v213
    %v234 = vpack.c.b16 %v216, %v215
    %v235 = vpack.c.b16 %v218, %v217
    %v236 = vpack.c.b16 %v220, %v219
    %v269 = vunpack.c.l.b16 %v141
    %v270 = vunpack.c.l.b16 %v142
    %v271 = vunpack.c.l.b16 %v143
    %v272 = vunpack.c.l.b16 %v144
    %v273 = vunpack.c.l.b16 %v145
    %v274 = vunpack.c.l.b16 %v146
    %v275 = vunpack.c.l.b16 %v147
    %v276 = vunpack.c.l.b16 %v148
    %v277 = vunpack.c.l.b16 %v149
    %v278 = vunpack.c.l.b16 %v150
    %v279 = vunpack.c.l.b16 %v151
    %v280 = vunpack.c.l.b16 %v152
    %v281 = vunpack.c.l.b16 %v153
    %v282 = vunpack.c.l.b16 %v154
    %v283 = vunpack.c.l.b16 %v155
    %v284 = vunpack.c.l.b16 %v156
    %v285 = vpack.c.b16 %v270, %v269
    %v286 = vpack.c.b16 %v272, %v271
    %v287 = vpack.c.b16 %v274, %v273
    %v288 = vpack.c.b16 %v276, %v275
    %v289 = vpack.c.b16 %v278, %v277
    %v290 = vpack.c.b16 %v280, %v279
    %v291 = vpack.c.b16 %v282, %v281
    %v292 = vpack.c.b16 %v284, %v283
    %301 = vmatprep.subr.bf16.mxu0 0
    %302 = vmatpush1.bf16.msra.mxu0 %v285
    %303 = vmatprep.subr.bf16.mxu0 0
    %304 = vmatpush1.bf16.msra.mxu0 %v286
    %305 = vmatprep.subr.bf16.mxu0 0
    %306 = vmatpush1.bf16.msra.mxu0 %v287
    %307 = vmatprep.subr.bf16.mxu0 0
    %308 = vmatpush1.bf16.msra.mxu0 %v288
    %309 = vmatprep.subr.bf16.mxu0 0
    %310 = vmatpush1.bf16.msra.mxu0 %v289
    %311 = vmatprep.subr.bf16.mxu0 0
    %312 = vmatpush1.bf16.msra.mxu0 %v290
    %313 = vmatprep.subr.bf16.mxu0 0
    %314 = vmatpush1.bf16.msra.mxu0 %v291
    %315 = vmatprep.subr.bf16.mxu0 0
    %316 = vmatpush1.bf16.msra.mxu0 %v292
    %317 = vmatprep.subr.bf16.mxu0 0
    %318 = vmatpush1.bf16.msra.mxu0 0
    %319 = vmatprep.subr.bf16.mxu0 0
    %320 = vmatpush1.bf16.msra.mxu0 0
    %321 = vmatprep.subr.bf16.mxu0 0
    %322 = vmatpush1.bf16.msra.mxu0 0
    %323 = vmatprep.subr.bf16.mxu0 0
    %324 = vmatpush1.bf16.msra.mxu0 0
    %325 = vmatprep.subr.bf16.mxu0 0
    %326 = vmatpush1.bf16.msra.mxu0 0
    %327 = vmatprep.subr.bf16.mxu0 0
    %328 = vmatpush1.bf16.msra.mxu0 0
    %329 = vmatprep.subr.bf16.mxu0 0
    %330 = vmatpush1.bf16.msra.mxu0 0
    %331 = vmatprep.subr.bf16.mxu0 0
    %332 = vmatpush1.bf16.msra.mxu0 0
    %333 = vmatprep.mubr.bf16.mxu0 0
    %334 = vmatmul.mubr.bf16.gmra.mrb[0].mxu0 %v221
    %v335 = vpop.f32.mrb[0].mxu0
    %v336 = vadd.f32 0.0, %v335
    %v337 = vpop.f32.mrb[0].mxu0
    %v338 = vpop.f32.mrb[0].mxu0
    %v339 = vadd.f32 0.0, %v338
    %v340 = vpop.f32.mrb[0].mxu0
    %341 = vmatprep.mubr.bf16.mxu0 0
    %342 = vmatmul.mubr.bf16.gmra.mrb[0].mxu0 %v222
    %v343 = vpop.f32.mrb[0].mxu0
    %v344 = vadd.f32 0.0, %v343
    %v345 = vpop.f32.mrb[0].mxu0
    %v346 = vpop.f32.mrb[0].mxu0
    %v347 = vadd.f32 0.0, %v346
    %v348 = vpop.f32.mrb[0].mxu0
    %349 = vmatprep.mubr.bf16.mxu0 0
    %350 = vmatmul.mubr.bf16.gmra.mrb[0].mxu0 %v223
    %v351 = vpop.f32.mrb[0].mxu0
    %v352 = vadd.f32 0.0, %v351
    %v353 = vpop.f32.mrb[0].mxu0
    %v354 = vpop.f32.mrb[0].mxu0
    %v355 = vadd.f32 0.0, %v354
    %v356 = vpop.f32.mrb[0].mxu0
    %357 = vmatprep.mubr.bf16.mxu0 0
    %358 = vmatmul.mubr.bf16.gmra.mrb[0].mxu0 %v224
    %v359 = vpop.f32.mrb[0].mxu0
    %v360 = vadd.f32 0.0, %v359
    %v361 = vpop.f32.mrb[0].mxu0
    %v362 = vpop.f32.mrb[0].mxu0
    %v363 = vadd.f32 0.0, %v362
    %v364 = vpop.f32.mrb[0].mxu0
    %365 = vmatprep.mubr.bf16.mxu0 0
    %366 = vmatmul.mubr.bf16.gmra.mrb[0].mxu0 %v225
    %v367 = vpop.f32.mrb[0].mxu0
    %v368 = vadd.f32 0.0, %v367
    %v369 = vpop.f32.mrb[0].mxu0
    %v370 = vpop.f32.mrb[0].mxu0
    %v371 = vadd.f32 0.0, %v370
    %v372 = vpop.f32.mrb[0].mxu0
    %373 = vmatprep.mubr.bf16.mxu0 0
    %374 = vmatmul.mubr.bf16.gmra.mrb[0].mxu0 %v226
    %v375 = vpop.f32.mrb[0].mxu0
    %v376 = vadd.f32 0.0, %v375
    %v377 = vpop.f32.mrb[0].mxu0
    %v378 = vpop.f32.mrb[0].mxu0
    %v379 = vadd.f32 0.0, %v378
    %v380 = vpop.f32.mrb[0].mxu0
    %381 = vmatprep.mubr.bf16.mxu0 0
    %382 = vmatmul.mubr.bf16.gmra.mrb[0].mxu0 %v227
    %v383 = vpop.f32.mrb[0].mxu0
    %v384 = vadd.f32 0.0, %v383
    %v385 = vpop.f32.mrb[0].mxu0
    %v386 = vpop.f32.mrb[0].mxu0
    %v387 = vadd.f32 0.0, %v386
    %v388 = vpop.f32.mrb[0].mxu0
    %389 = vmatprep.mubr.bf16.mxu0 0
    %390 = vmatmul.mubr.bf16.gmra.mrb[0].mxu0 %v228
    %v391 = vpop.f32.mrb[0].mxu0
    %v392 = vadd.f32 0.0, %v391
    %v393 = vpop.f32.mrb[0].mxu0
    %v394 = vpop.f32.mrb[0].mxu0
    %v395 = vadd.f32 0.0, %v394
    %v396 = vpop.f32.mrb[0].mxu0
    %397 = vmatprep.mubr.bf16.mxu0 0
    %398 = vmatmul.mubr.bf16.gmra.mrb[0].mxu0 %v229
    %v399 = vpop.f32.mrb[0].mxu0
    %v400 = vadd.f32 0.0, %v399
    %v401 = vpop.f32.mrb[0].mxu0
    %v402 = vpop.f32.mrb[0].mxu0
    %v403 = vadd.f32 0.0, %v402
    %v404 = vpop.f32.mrb[0].mxu0
    %405 = vmatprep.mubr.bf16.mxu0 0
    %406 = vmatmul.mubr.bf16.gmra.mrb[0].mxu0 %v230
    %v407 = vpop.f32.mrb[0].mxu0
    %v408 = vadd.f32 0.0, %v407
    %v409 = vpop.f32.mrb[0].mxu0
    %v410 = vpop.f32.mrb[0].mxu0
    %v411 = vadd.f32 0.0, %v410
    %v412 = vpop.f32.mrb[0].mxu0
    %413 = vmatprep.mubr.bf16.mxu0 0
    %414 = vmatmul.mubr.bf16.gmra.mrb[0].mxu0 %v231
    %v415 = vpop.f32.mrb[0].mxu0
    %v416 = vadd.f32 0.0, %v415
    %v417 = vpop.f32.mrb[0].mxu0
    %v418 = vpop.f32.mrb[0].mxu0
    %v419 = vadd.f32 0.0, %v418
    %v420 = vpop.f32.mrb[0].mxu0
    %421 = vmatprep.mubr.bf16.mxu0 0
    %422 = vmatmul.mubr.bf16.gmra.mrb[0].mxu0 %v232
    %v423 = vpop.f32.mrb[0].mxu0
    %v424 = vadd.f32 0.0, %v423
    %v425 = vpop.f32.mrb[0].mxu0
    %v426 = vpop.f32.mrb[0].mxu0
    %v427 = vadd.f32 0.0, %v426
    %v428 = vpop.f32.mrb[0].mxu0
    %429 = vmatprep.mubr.bf16.mxu0 0
    %430 = vmatmul.mubr.bf16.gmra.mrb[0].mxu0 %v233
    %v431 = vpop.f32.mrb[0].mxu0
    %v432 = vadd.f32 0.0, %v431
    %v433 = vpop.f32.mrb[0].mxu0
    %v434 = vpop.f32.mrb[0].mxu0
    %v435 = vadd.f32 0.0, %v434
    %v436 = vpop.f32.mrb[0].mxu0
    %437 = vmatprep.mubr.bf16.mxu0 0
    %438 = vmatmul.mubr.bf16.gmra.mrb[0].mxu0 %v234
    %v439 = vpop.f32.mrb[0].mxu0
    %v440 = vadd.f32 0.0, %v439
    %v441 = vpop.f32.mrb[0].mxu0
    %v442 = vpop.f32.mrb[0].mxu0
    %v443 = vadd.f32 0.0, %v442
    %v444 = vpop.f32.mrb[0].mxu0
    %445 = vmatprep.mubr.bf16.mxu0 0
    %446 = vmatmul.mubr.bf16.gmra.mrb[0].mxu0 %v235
    %v447 = vpop.f32.mrb[0].mxu0
    %v448 = vadd.f32 0.0, %v447
    %v449 = vpop.f32.mrb[0].mxu0
    %v450 = vpop.f32.mrb[0].mxu0
    %v451 = vadd.f32 0.0, %v450
    %v452 = vpop.f32.mrb[0].mxu0
    %453 = vmatprep.mubr.bf16.mxu0 0
    %454 = vmatmul.mubr.bf16.gmra.mrb[0].mxu0 %v236
    %v455 = vpop.f32.mrb[0].mxu0
    %v456 = vadd.f32 0.0, %v455
    %v457 = vpop.f32.mrb[0].mxu0
    %v458 = vpop.f32.mrb[0].mxu0
    %v459 = vadd.f32 0.0, %v458
    %v460 = vpop.f32.mrb[0].mxu0
    %461 = vdwg.mxu0
    %v462 = vadd.f32 %v77, %v336
    %v463 = vadd.f32 %v78, %v339
    %v464 = vadd.f32 %v79, %v344
    %v465 = vadd.f32 %v80, %v347
    %v466 = vadd.f32 %v81, %v352
    %v467 = vadd.f32 %v82, %v355
    %v468 = vadd.f32 %v83, %v360
    %v469 = vadd.f32 %v84, %v363
    %v470 = vadd.f32 %v85, %v368
    %v471 = vadd.f32 %v86, %v371
    %v472 = vadd.f32 %v87, %v376
    %v473 = vadd.f32 %v88, %v379
    %v474 = vadd.f32 %v89, %v384
    %v475 = vadd.f32 %v90, %v387
    %v476 = vadd.f32 %v91, %v392
    %v477 = vadd.f32 %v92, %v395
    %v478 = vadd.f32 %v93, %v400
    %v479 = vadd.f32 %v94, %v403
    %v480 = vadd.f32 %v95, %v408
    %v481 = vadd.f32 %v96, %v411
    %v482 = vadd.f32 %v97, %v416
    %v483 = vadd.f32 %v98, %v419
    %v484 = vadd.f32 %v99, %v424
    %v485 = vadd.f32 %v100, %v427
    %v486 = vadd.f32 %v101, %v432
    %v487 = vadd.f32 %v102, %v435
    %v488 = vadd.f32 %v103, %v440
    %v489 = vadd.f32 %v104, %v443
    %v490 = vadd.f32 %v105, %v448
    %v491 = vadd.f32 %v106, %v451
    %v492 = vadd.f32 %v107, %v456
    %v493 = vadd.f32 %v108, %v459
    %494 = vst [vmem:[#allocation7] sm:$0xff] %v462
    %495 = vst [vmem:[#allocation7 + $0x8] sm:$0xff] %v463
    %496 = vst [vmem:[#allocation7 + $0x10] sm:$0xff] %v464
    %497 = vst [vmem:[#allocation7 + $0x18] sm:$0xff] %v465
    %498 = vst [vmem:[#allocation7 + $0x20] sm:$0xff] %v466
    %499 = vst [vmem:[#allocation7 + $0x28] sm:$0xff] %v467
    %500 = vst [vmem:[#allocation7 + $0x30] sm:$0xff] %v468
    %501 = vst [vmem:[#allocation7 + $0x38] sm:$0xff] %v469
    %502 = vst [vmem:[#allocation7 + $0x40] sm:$0xff] %v470
    %503 = vst [vmem:[#allocation7 + $0x48] sm:$0xff] %v471
    %504 = vst [vmem:[#allocation7 + $0x50] sm:$0xff] %v472
    %505 = vst [vmem:[#allocation7 + $0x58] sm:$0xff] %v473
    %506 = vst [vmem:[#allocation7 + $0x60] sm:$0xff] %v474
    %507 = vst [vmem:[#allocation7 + $0x68] sm:$0xff] %v475
    %508 = vst [vmem:[#allocation7 + $0x70] sm:$0xff] %v476
    %509 = vst [vmem:[#allocation7 + $0x78] sm:$0xff] %v477
    %510 = vst [vmem:[#allocation7 + $0x80] sm:$0xff] %v478
    %511 = vst [vmem:[#allocation7 + $0x88] sm:$0xff] %v479
    %512 = vst [vmem:[#allocation7 + $0x90] sm:$0xff] %v480
    %513 = vst [vmem:[#allocation7 + $0x98] sm:$0xff] %v481
    %514 = vst [vmem:[#allocation7 + $0xa0] sm:$0xff] %v482
    %515 = vst [vmem:[#allocation7 + $0xa8] sm:$0xff] %v483
    %516 = vst [vmem:[#allocation7 + $0xb0] sm:$0xff] %v484
    %517 = vst [vmem:[#allocation7 + $0xb8] sm:$0xff] %v485
    %518 = vst [vmem:[#allocation7 + $0xc0] sm:$0xff] %v486
    %519 = vst [vmem:[#allocation7 + $0xc8] sm:$0xff] %v487
    %520 = vst [vmem:[#allocation7 + $0xd0] sm:$0xff] %v488
    %521 = vst [vmem:[#allocation7 + $0xd8] sm:$0xff] %v489
    %522 = vst [vmem:[#allocation7 + $0xe0] sm:$0xff] %v490
    %523 = vst [vmem:[#allocation7 + $0xe8] sm:$0xff] %v491
    %524 = vst [vmem:[#allocation7 + $0xf0] sm:$0xff] %v492
    %525 = vst [vmem:[#allocation7 + $0xf8] sm:$0xff] %v493
    // Predicated region
    $region22: #{tpu_custom_call.1} parent=1 // pred_check
      _
    $region23: #{tpu_custom_call.1} parent=1 // pred_check_branch
      %527 = sbr.rel (0) target = $region25
    $region24: #{tpu_custom_call.1} parent=1 // pred_region
      %s529 = ssub.s32 4096, 4096
      %530 = vsyncadd [#allocation4], %s529
      %s531 = sshll.u32 [#allocation7], 4
      %s532 = int_to_ptr.vmem [resolvable:$true] %s531
      %537 = dma.vmem_to_hbm [thread:$0]  %s532, 4096, %s2, [#allocation4], 128, 128, 8
    $region25: #{tpu_custom_call.1} parent=1 // pred_fallthru
      _
    // Predicated region
    $region26: #{tpu_custom_call.1} parent=1 // pred_check
      _
    $region27: #{tpu_custom_call.1} parent=1 // pred_check_branch
      %539 = sbr.rel (0) target = $region29
    $region28: #{tpu_custom_call.1} parent=1 // pred_region
      %540 = dma.done [#allocation4], 4096
    $region29: #{tpu_custom_call.1} parent=1 // pred_fallthru
      _
    %541 = vsyncpa [#allocation3], 1
    %542 = vsyncpa [#allocation6], 1
    %543 = vsyncpa [#allocation4], 1

</llo_original>
